<compile_context>
chip_gen: v7x
topology: tpu7x:2x2x1
jax: 0.10.0
libtpu: 0.0.40
codegen_flags: <defaults>
</compile_context>

<pallas_src>
import functools

import jax
import jax.numpy as jnp
from jax.experimental import pallas as pl
from jax.experimental.pallas import tpu as pltpu


_ACTS = {
    "relu": jax.nn.relu,
    "leaky_relu": lambda x: jax.nn.leaky_relu(x, negative_slope=0.01),
    "tanh": jnp.tanh,
    "sigmoid": jax.nn.sigmoid,
}


def _round_up(v, m):
    return -(-v // m) * m


def _mlp_kernel(*refs, num_layers, act, matmul_dtype):
    # refs = (x_ref, w_ref_0, ..., w_ref_{L-1}, o_ref)
    # x_ref:   (B_T, F_pad)            -- one batch tile
    # w_ref_i: (Din_pad_i, Dout_pad_i) -- padded, pre-transposed (in, out)
    # o_ref:   (B_T, E_pad)
    x_ref = refs[0]
    w_refs = refs[1:1 + num_layers]
    o_ref = refs[1 + num_layers]

    h = x_ref[...]
    for i, w_ref in enumerate(w_refs):
        if matmul_dtype is None:
            lhs, rhs = h, w_ref[...]
        else:
            lhs, rhs = h.astype(matmul_dtype), w_ref[...].astype(matmul_dtype)
        h = jnp.dot(lhs, rhs, preferred_element_type=jnp.float32)
        if i != num_layers - 1:      # final LinearBlock has activation=None
            h = act(h)
    o_ref[...] = h.astype(o_ref.dtype)


def mlp_forward(x, weights, *, activation="tanh", batch_tile=None,
                matmul_dtype=None):
    """MLPnet forward pass.

    x:       (N, n_features) float32
    weights: list of torch-style Linear weights, each (out_features, in_features)
    returns: (N, n_emb) float32
    """
    N, F = x.shape
    num_layers = len(weights)
    out_dims = [int(w.shape[0]) for w in weights]
    in_dims = [F] + out_dims[:-1]
    for w, d_in in zip(weights, in_dims):
        assert w.shape[1] == d_in, "weight chain mismatch"

    # Padded (lane-dense) feature dimensions.
    dims_pad = [_round_up(d, 128) for d in [F] + out_dims]

    # Batch tile: multiple of 8 (sublane), big enough to amortize per-step
    # overhead, small enough that activations + double-buffered tiles fit VMEM.
    if batch_tile is None:
        batch_tile = min(512, _round_up(N, 8))
    batch_tile = _round_up(batch_tile, 8)
    N_pad = _round_up(N, batch_tile)

    # Pad input and weights with zeros (exact: bias-free chain, see header).
    x_pad = jnp.zeros((N_pad, dims_pad[0]), jnp.float32).at[:N, :F].set(x)
    w_pads = []
    for li, w in enumerate(weights):
        d_in_pad, d_out_pad = dims_pad[li], dims_pad[li + 1]
        wp = (jnp.zeros((d_in_pad, d_out_pad), jnp.float32)
              .at[:w.shape[1], :w.shape[0]].set(jnp.transpose(w)))
        w_pads.append(wp)

    grid = (N_pad // batch_tile,)
    kernel = functools.partial(_mlp_kernel, num_layers=num_layers,
                               act=_ACTS[activation], matmul_dtype=matmul_dtype)

    in_specs = [pl.BlockSpec((batch_tile, dims_pad[0]), lambda i: (i, 0))]
    for li in range(num_layers):
        # Constant block index -> weight tile stays resident across batch steps.
        in_specs.append(
            pl.BlockSpec((dims_pad[li], dims_pad[li + 1]), lambda i: (0, 0)))

    out_pad = pl.pallas_call(
        kernel,
        out_shape=jax.ShapeDtypeStruct((N_pad, dims_pad[-1]), jnp.float32),
        grid_spec=pltpu.PrefetchScalarGridSpec(
            num_scalar_prefetch=0,
            grid=grid,
            in_specs=in_specs,
            out_specs=pl.BlockSpec((batch_tile, dims_pad[-1]),
                                   lambda i: (i, 0)),
        ),
        compiler_params=pltpu.CompilerParams(
            dimension_semantics=("parallel",),
            vmem_limit_bytes=64 << 20),
    )(x_pad, *w_pads)

    return out_pad[:N, :out_dims[-1]]


def init_params(key, n_features, n_hidden, n_emb):
    """torch.nn.Linear-style uniform(-1/sqrt(fan_in), 1/sqrt(fan_in)) weights,
    stored torch-style as (out_features, in_features)."""
    dims = [n_features] + list(n_hidden) + [n_emb]
    keys = jax.random.split(key, len(dims) - 1)
    weights = []
    for k, d_in, d_out in zip(keys, dims[:-1], dims[1:]):
        bound = 1.0 / float(d_in) ** 0.5
        weights.append(
            jax.random.uniform(k, (d_out, d_in), jnp.float32, -bound, bound))
    return weights


def _reference(x, weights, activation="tanh"):
    """Pure-JAX reference matching MLPnet.forward (bias=False, no dropout,
    no skip connection, no batch ensemble)."""
    act = _ACTS[activation]
    h = x
    for i, w in enumerate(weights):
        h = h @ jnp.transpose(w)
        if i != len(weights) - 1:
            h = act(h)
    return h


if __name__ == "__main__":
    # Small shapes consistent with MLPnet: x is (batch, n_features).
    N, N_FEATURES, N_HIDDEN, N_EMB = 8, 16, [32, 16], 8
    ACT = "tanh"

    key = jax.random.PRNGKey(0)
    kx, kp = jax.random.split(key)
    x = jax.random.normal(kx, (N, N_FEATURES), jnp.float32)
    weights = init_params(kp, N_FEATURES, N_HIDDEN, N_EMB)

    out = mlp_forward(x, weights, activation=ACT)
    out = jax.block_until_ready(out)

    ref = _reference(x, weights, activation=ACT)
    assert out.shape == (N, N_EMB)
    assert jnp.allclose(out, ref, atol=1e-4, rtol=1e-4)

    print("KERNEL_OK")
</pallas_src>

<mosaic_0001>
module attributes {stable_mosaic.version = 11 : i64} {
  func.func @_mlp_kernel(%arg0: i32, %arg1: memref<8x128xf32, #tpu.memory_space<vmem>>, %arg2: memref<128x128xf32, #tpu.memory_space<vmem>>, %arg3: memref<128x128xf32, #tpu.memory_space<vmem>>, %arg4: memref<128x128xf32, #tpu.memory_space<vmem>>, %arg5: memref<8x128xf32, #tpu.memory_space<vmem>>) attributes {dimension_semantics = [#tpu.dimension_semantics<parallel>], iteration_bounds = array<i64: 1>, scalar_prefetch = 0 : i64, scratch_operands = 0 : i64, tpu.core_type = #tpu.core_type<tc>, window_params = [{transform_indices = @transform_0, window_bounds = array<i64: 8, 128>}, {pipeline_mode = #tpu.pipeline_mode<synchronous>, transform_indices = @transform_1, window_bounds = array<i64: 128, 128>}, {pipeline_mode = #tpu.pipeline_mode<synchronous>, transform_indices = @transform_2, window_bounds = array<i64: 128, 128>}, {pipeline_mode = #tpu.pipeline_mode<synchronous>, transform_indices = @transform_3, window_bounds = array<i64: 128, 128>}, {transform_indices = @transform_4, window_bounds = array<i64: 8, 128>}]} {
    %c0 = arith.constant 0 : index
    %c0_0 = arith.constant 0 : index
    %0 = vector.load %arg1[%c0, %c0_0] : memref<8x128xf32, #tpu.memory_space<vmem>>, vector<8x128xf32>
    %c0_1 = arith.constant 0 : index
    %c0_2 = arith.constant 0 : index
    %1 = vector.load %arg2[%c0_1, %c0_2] : memref<128x128xf32, #tpu.memory_space<vmem>>, vector<128x128xf32>
    %cst = arith.constant dense<0.000000e+00> : vector<8x128xf32>
    %2 = tpu.matmul %0, %1, %cst {dimension_numbers = #tpu.dot_dimension_numbers<[1], [0], [0], [1], [0, 0, 1, 1], [], []>} : vector<8x128xf32>, vector<128x128xf32>, vector<8x128xf32> -> vector<8x128xf32>
    %3 = math.tanh %2 : vector<8x128xf32>
    %c0_3 = arith.constant 0 : index
    %c0_4 = arith.constant 0 : index
    %4 = vector.load %arg3[%c0_3, %c0_4] : memref<128x128xf32, #tpu.memory_space<vmem>>, vector<128x128xf32>
    %cst_5 = arith.constant dense<0.000000e+00> : vector<8x128xf32>
    %5 = tpu.matmul %3, %4, %cst_5 {dimension_numbers = #tpu.dot_dimension_numbers<[1], [0], [0], [1], [0, 0, 1, 1], [], []>} : vector<8x128xf32>, vector<128x128xf32>, vector<8x128xf32> -> vector<8x128xf32>
    %6 = math.tanh %5 : vector<8x128xf32>
    %c0_6 = arith.constant 0 : index
    %c0_7 = arith.constant 0 : index
    %7 = vector.load %arg4[%c0_6, %c0_7] : memref<128x128xf32, #tpu.memory_space<vmem>>, vector<128x128xf32>
    %cst_8 = arith.constant dense<0.000000e+00> : vector<8x128xf32>
    %8 = tpu.matmul %6, %7, %cst_8 {dimension_numbers = #tpu.dot_dimension_numbers<[1], [0], [0], [1], [0, 0, 1, 1], [], []>} : vector<8x128xf32>, vector<128x128xf32>, vector<8x128xf32> -> vector<8x128xf32>
    %c0_9 = arith.constant 0 : index
    %c0_10 = arith.constant 0 : index
    %9 = vector.load %arg5[%c0_9, %c0_10] : memref<8x128xf32, #tpu.memory_space<vmem>>, vector<8x128xf32>
    tpu.vector_store %arg5[%c0_9, %c0_10], %8 {strides = array<i32>} : memref<8x128xf32, #tpu.memory_space<vmem>>, vector<8x128xf32>,
    return
  }
  func.func @transform_0(%arg0: i32) -> (i32, i32) {
    %c0_i32 = arith.constant 0 : i32
    %c0_i32_0 = arith.constant 0 : i32
    return %arg0, %c0_i32 : i32, i32
  }
  func.func @transform_1(%arg0: i32) -> (i32, i32) {
    %c0_i32 = arith.constant 0 : i32
    %c0_i32_0 = arith.constant 0 : i32
    %c0_i32_1 = arith.constant 0 : i32
    return %c0_i32, %c0_i32_0 : i32, i32
  }
  func.func @transform_2(%arg0: i32) -> (i32, i32) {
    %c0_i32 = arith.constant 0 : i32
    %c0_i32_0 = arith.constant 0 : i32
    %c0_i32_1 = arith.constant 0 : i32
    return %c0_i32, %c0_i32_0 : i32, i32
  }
  func.func @transform_3(%arg0: i32) -> (i32, i32) {
    %c0_i32 = arith.constant 0 : i32
    %c0_i32_0 = arith.constant 0 : i32
    %c0_i32_1 = arith.constant 0 : i32
    return %c0_i32, %c0_i32_0 : i32, i32
  }
  func.func @transform_4(%arg0: i32) -> (i32, i32) {
    %c0_i32 = arith.constant 0 : i32
    %c0_i32_0 = arith.constant 0 : i32
    return %arg0, %c0_i32 : i32, i32
  }
}

</mosaic_0001>

<llo_original>
// kernel: tpu_custom_call.1
$region0: #{tpu_custom_call.1}
  #allocation0 [shape = 'u32[]', space=smem, size = 0x4, offset = 0x4, fixed_abs, tag = 'smem constant byte address 0x4 - core index']
  #allocation1 [shape = 'u32[144,128]{1,0:T(1,128)}', space=vmem, size = 0x12000, scoped, tag = 'internal scratch']
  %s0 = inlined_call_operand.hbm [shape: f32[8,128], index: 0, kind: input, shape index: {}]
  %s1 = inlined_call_operand.hbm [shape: f32[128,128], index: 1, kind: input, shape index: {}]
  %s2 = inlined_call_operand.hbm [shape: f32[128,128], index: 2, kind: input, shape index: {}]
  %s3 = inlined_call_operand.hbm [shape: f32[128,128], index: 3, kind: input, shape index: {}]
  %s4 = inlined_call_operand.hbm [shape: f32[8,128], index: 4, kind: output, shape index: {}]
  %s5 = sld [smem:[#allocation0]]
  $region42: #{tpu_custom_call.1} parent=0
    _
  %s7 = ssub.s32 1, %s5
  %s8 = scalar_select 0, %s7, %s5
  $region1: #{tpu_custom_call.1} parent=0
    #allocation2 [shape = 'u8[4096]{0}', space=vmem, size = 0x1000, scoped, tag = 'input window, operand 0, single buffered']
    #allocation3 [shape = 's32[1]{0}', space=sflag, size = 0x4, scoped, tag = 'scoped memory for tpu_custom_call.1']
    #allocation4 [shape = 's32[1]{0}', space=sflag, size = 0x4, scoped, tag = 'scoped memory for tpu_custom_call.1']
    #allocation5 [shape = 'u8[65536]{0}', space=vmem, size = 0x10000, scoped, tag = 'input window, operand 1, single buffered']
    #allocation6 [shape = 's32[1]{0}', space=sflag, size = 0x4, scoped, tag = 'scoped memory for tpu_custom_call.1']
    #allocation7 [shape = 'u8[65536]{0}', space=vmem, size = 0x10000, scoped, tag = 'input window, operand 2, single buffered']
    #allocation8 [shape = 'u8[65536]{0}', space=vmem, size = 0x10000, scoped, tag = 'input window, operand 3, single buffered']
    #allocation9 [shape = 's32[1]{0}', space=sflag, size = 0x4, scoped, tag = 'scoped memory for tpu_custom_call.1']
    #allocation10 [shape = 'u8[4096]{0}', space=vmem, size = 0x1000, scoped, tag = 'output window, operand 0, single buffered']
    %9 = vsyncpa [#allocation3], 0
    %10 = vsyncpa [#allocation6], 0
    %11 = vsyncpa [#allocation9], 0
    %12 = vsyncpa [#allocation4], 0
    // Predicated region
    $region2: #{tpu_custom_call.1} parent=1 // pred_check
      _
    $region3: #{tpu_custom_call.1} parent=1 // pred_check_branch
      %14 = sbr.rel (0) target = $region5
    $region4: #{tpu_custom_call.1} parent=1 // pred_region
      %s16 = ssub.s32 128, 128
      %17 = vsyncadd [#allocation3], %s16
      %s19 = sshll.u32 [#allocation2], 4
      %s20 = int_to_ptr.vmem [resolvable:$true] %s19
      %22 = dma.hbm_to_vmem [thread:$0]  %s0, 128, %s20, [#allocation3]
    $region5: #{tpu_custom_call.1} parent=1 // pred_fallthru
      _
    // Predicated region
    $region6: #{tpu_custom_call.1} parent=1 // pred_check
      _
    $region7: #{tpu_custom_call.1} parent=1 // pred_check_branch
      %24 = sbr.rel (0) target = $region9
    $region8: #{tpu_custom_call.1} parent=1 // pred_region
      %s26 = ssub.s32 2048, 2048
      %27 = vsyncadd [#allocation6], %s26
      %s28 = sshll.u32 [#allocation5], 4
      %s29 = int_to_ptr.vmem [resolvable:$true] %s28
      %34 = dma.hbm_to_vmem [thread:$0]  %s1, 2048, %s29, [#allocation6], 128, 128, 8
    $region9: #{tpu_custom_call.1} parent=1 // pred_fallthru
      _
    // Predicated region
    $region10: #{tpu_custom_call.1} parent=1 // pred_check
      _
    $region11: #{tpu_custom_call.1} parent=1 // pred_check_branch
      %36 = sbr.rel (0) target = $region13
    $region12: #{tpu_custom_call.1} parent=1 // pred_region
      %s38 = ssub.s32 2048, 2048
      %39 = vsyncadd [#allocation6], %s38
      %s40 = sshll.u32 [#allocation7], 4
      %s41 = int_to_ptr.vmem [resolvable:$true] %s40
      %46 = dma.hbm_to_vmem [thread:$0]  %s2, 2048, %s41, [#allocation6], 128, 128, 8
    $region13: #{tpu_custom_call.1} parent=1 // pred_fallthru
      _
    // Predicated region
    $region14: #{tpu_custom_call.1} parent=1 // pred_check
      _
    $region15: #{tpu_custom_call.1} parent=1 // pred_check_branch
      %48 = sbr.rel (0) target = $region17
    $region16: #{tpu_custom_call.1} parent=1 // pred_region
      %s50 = ssub.s32 2048, 2048
      %51 = vsyncadd [#allocation9], %s50
      %s52 = sshll.u32 [#allocation8], 4
      %s53 = int_to_ptr.vmem [resolvable:$true] %s52
      %58 = dma.hbm_to_vmem [thread:$0]  %s3, 2048, %s53, [#allocation9], 128, 128, 8
    $region17: #{tpu_custom_call.1} parent=1 // pred_fallthru
      _
    // Predicated region
    $region18: #{tpu_custom_call.1} parent=1 // pred_check
      _
    $region19: #{tpu_custom_call.1} parent=1 // pred_check_branch
      %60 = sbr.rel (0) target = $region21
    $region20: #{tpu_custom_call.1} parent=1 // pred_region
      %61 = dma.done [#allocation3], 128
    $region21: #{tpu_custom_call.1} parent=1 // pred_fallthru
      _
    // Predicated region
    $region22: #{tpu_custom_call.1} parent=1 // pred_check
      _
    $region23: #{tpu_custom_call.1} parent=1 // pred_check_branch
      %63 = sbr.rel (0) target = $region25
    $region24: #{tpu_custom_call.1} parent=1 // pred_region
      %64 = dma.done [#allocation6], 2048
    $region25: #{tpu_custom_call.1} parent=1 // pred_fallthru
      _
    // Predicated region
    $region26: #{tpu_custom_call.1} parent=1 // pred_check
      _
    $region27: #{tpu_custom_call.1} parent=1 // pred_check_branch
      %66 = sbr.rel (0) target = $region29
    $region28: #{tpu_custom_call.1} parent=1 // pred_region
      %67 = dma.done [#allocation6], 2048
    $region29: #{tpu_custom_call.1} parent=1 // pred_fallthru
      _
    // Predicated region
    $region30: #{tpu_custom_call.1} parent=1 // pred_check
      _
    $region31: #{tpu_custom_call.1} parent=1 // pred_check_branch
      %69 = sbr.rel (0) target = $region33
    $region32: #{tpu_custom_call.1} parent=1 // pred_region
      %70 = dma.done [#allocation9], 2048
    $region33: #{tpu_custom_call.1} parent=1 // pred_fallthru
      _
    %v71 = vld [vmem:[#allocation2] sm:$0xff]
    %v72 = vld [vmem:[#allocation5] sm:$0xff]
    %v73 = vld [vmem:[#allocation5 + $0x8] sm:$0xff]
    %v74 = vld [vmem:[#allocation5 + $0x10] sm:$0xff]
    %v75 = vld [vmem:[#allocation5 + $0x18] sm:$0xff]
    %v76 = vld [vmem:[#allocation5 + $0x20] sm:$0xff]
    %v77 = vld [vmem:[#allocation5 + $0x28] sm:$0xff]
    %v78 = vld [vmem:[#allocation5 + $0x30] sm:$0xff]
    %v79 = vld [vmem:[#allocation5 + $0x38] sm:$0xff]
    %v80 = vld [vmem:[#allocation5 + $0x40] sm:$0xff]
    %v81 = vld [vmem:[#allocation5 + $0x48] sm:$0xff]
    %v82 = vld [vmem:[#allocation5 + $0x50] sm:$0xff]
    %v83 = vld [vmem:[#allocation5 + $0x58] sm:$0xff]
    %v84 = vld [vmem:[#allocation5 + $0x60] sm:$0xff]
    %v85 = vld [vmem:[#allocation5 + $0x68] sm:$0xff]
    %v86 = vld [vmem:[#allocation5 + $0x70] sm:$0xff]
    %v87 = vld [vmem:[#allocation5 + $0x78] sm:$0xff]
    %88 = vmatprep.subr.mxu0 0.0
    %89 = vmatpush1.msra.mxu0 %v72
    %90 = vmatprep.subr.mxu0 0.0
    %91 = vmatpush1.msra.mxu0 %v73
    %92 = vmatprep.subr.mxu0 0.0
    %93 = vmatpush1.msra.mxu0 %v74
    %94 = vmatprep.subr.mxu0 0.0
    %95 = vmatpush1.msra.mxu0 %v75
    %96 = vmatprep.subr.mxu0 0.0
    %97 = vmatpush1.msra.mxu0 %v76
    %98 = vmatprep.subr.mxu0 0.0
    %99 = vmatpush1.msra.mxu0 %v77
    %100 = vmatprep.subr.mxu0 0.0
    %101 = vmatpush1.msra.mxu0 %v78
    %102 = vmatprep.subr.mxu0 0.0
    %103 = vmatpush1.msra.mxu0 %v79
    %104 = vmatprep.subr.mxu0 0.0
    %105 = vmatpush1.msra.mxu0 %v80
    %106 = vmatprep.subr.mxu0 0.0
    %107 = vmatpush1.msra.mxu0 %v81
    %108 = vmatprep.subr.mxu0 0.0
    %109 = vmatpush1.msra.mxu0 %v82
    %110 = vmatprep.subr.mxu0 0.0
    %111 = vmatpush1.msra.mxu0 %v83
    %112 = vmatprep.subr.mxu0 0.0
    %113 = vmatpush1.msra.mxu0 %v84
    %114 = vmatprep.subr.mxu0 0.0
    %115 = vmatpush1.msra.mxu0 %v85
    %116 = vmatprep.subr.mxu0 0.0
    %117 = vmatpush1.msra.mxu0 %v86
    %118 = vmatprep.subr.mxu0 0.0
    %119 = vmatpush1.msra.mxu0 %v87
    %120 = vmatprep.subr.mxu0 0.0
    %121 = vmatpush1.msra.mxu0 0.0
    %122 = vmatprep.subr.mxu0 0.0
    %123 = vmatpush1.msra.mxu0 0.0
    %124 = vmatprep.subr.mxu0 0.0
    %125 = vmatpush1.msra.mxu0 0.0
    %126 = vmatprep.subr.mxu0 0.0
    %127 = vmatpush1.msra.mxu0 0.0
    %128 = vmatprep.subr.mxu0 0.0
    %129 = vmatpush1.msra.mxu0 0.0
    %130 = vmatprep.subr.mxu0 0.0
    %131 = vmatpush1.msra.mxu0 0.0
    %132 = vmatprep.subr.mxu0 0.0
    %133 = vmatpush1.msra.mxu0 0.0
    %134 = vmatprep.subr.mxu0 0.0
    %135 = vmatpush1.msra.mxu0 0.0
    %136 = vmatprep.subr.mxu0 0.0
    %137 = vmatpush1.msra.mxu0 0.0
    %138 = vmatprep.subr.mxu0 0.0
    %139 = vmatpush1.msra.mxu0 0.0
    %140 = vmatprep.subr.mxu0 0.0
    %141 = vmatpush1.msra.mxu0 0.0
    %142 = vmatprep.subr.mxu0 0.0
    %143 = vmatpush1.msra.mxu0 0.0
    %144 = vmatprep.subr.mxu0 0.0
    %145 = vmatpush1.msra.mxu0 0.0
    %146 = vmatprep.subr.mxu0 0.0
    %147 = vmatpush1.msra.mxu0 0.0
    %148 = vmatprep.subr.mxu0 0.0
    %149 = vmatpush1.msra.mxu0 0.0
    %150 = vmatprep.subr.mxu0 0.0
    %151 = vmatpush1.msra.mxu0 0.0
    %152 = vmatprep.mubr.f32.mxu0 0.0
    %153 = vmatmul.mubr.f32.gmra.mrb[0].mxu0 %v71
    %v154 = vpop.f32.mrb[0].mxu0
    %v155 = vadd.f32 0.0, %v154
    %v156 = vpop.f32.mrb[0].mxu0
    %157 = vdwg.mxu0
    %v158 = vtanh.pop %v155
    %v159 = vld [vmem:[#allocation7] sm:$0xff]
    %v160 = vld [vmem:[#allocation7 + $0x8] sm:$0xff]
    %v161 = vld [vmem:[#allocation7 + $0x10] sm:$0xff]
    %v162 = vld [vmem:[#allocation7 + $0x18] sm:$0xff]
    %v163 = vld [vmem:[#allocation7 + $0x20] sm:$0xff]
    %v164 = vld [vmem:[#allocation7 + $0x28] sm:$0xff]
    %v165 = vld [vmem:[#allocation7 + $0x30] sm:$0xff]
    %v166 = vld [vmem:[#allocation7 + $0x38] sm:$0xff]
    %v167 = vld [vmem:[#allocation7 + $0x40] sm:$0xff]
    %v168 = vld [vmem:[#allocation7 + $0x48] sm:$0xff]
    %v169 = vld [vmem:[#allocation7 + $0x50] sm:$0xff]
    %v170 = vld [vmem:[#allocation7 + $0x58] sm:$0xff]
    %v171 = vld [vmem:[#allocation7 + $0x60] sm:$0xff]
    %v172 = vld [vmem:[#allocation7 + $0x68] sm:$0xff]
    %v173 = vld [vmem:[#allocation7 + $0x70] sm:$0xff]
    %v174 = vld [vmem:[#allocation7 + $0x78] sm:$0xff]
    %175 = vmatprep.subr.mxu0 0.0
    %176 = vmatpush1.msra.mxu0 %v159
    %177 = vmatprep.subr.mxu0 0.0
    %178 = vmatpush1.msra.mxu0 %v160
    %179 = vmatprep.subr.mxu0 0.0
    %180 = vmatpush1.msra.mxu0 %v161
    %181 = vmatprep.subr.mxu0 0.0
    %182 = vmatpush1.msra.mxu0 %v162
    %183 = vmatprep.subr.mxu0 0.0
    %184 = vmatpush1.msra.mxu0 %v163
    %185 = vmatprep.subr.mxu0 0.0
    %186 = vmatpush1.msra.mxu0 %v164
    %187 = vmatprep.subr.mxu0 0.0
    %188 = vmatpush1.msra.mxu0 %v165
    %189 = vmatprep.subr.mxu0 0.0
    %190 = vmatpush1.msra.mxu0 %v166
    %191 = vmatprep.subr.mxu0 0.0
    %192 = vmatpush1.msra.mxu0 %v167
    %193 = vmatprep.subr.mxu0 0.0
    %194 = vmatpush1.msra.mxu0 %v168
    %195 = vmatprep.subr.mxu0 0.0
    %196 = vmatpush1.msra.mxu0 %v169
    %197 = vmatprep.subr.mxu0 0.0
    %198 = vmatpush1.msra.mxu0 %v170
    %199 = vmatprep.subr.mxu0 0.0
    %200 = vmatpush1.msra.mxu0 %v171
    %201 = vmatprep.subr.mxu0 0.0
    %202 = vmatpush1.msra.mxu0 %v172
    %203 = vmatprep.subr.mxu0 0.0
    %204 = vmatpush1.msra.mxu0 %v173
    %205 = vmatprep.subr.mxu0 0.0
    %206 = vmatpush1.msra.mxu0 %v174
    %207 = vmatprep.subr.mxu0 0.0
    %208 = vmatpush1.msra.mxu0 0.0
    %209 = vmatprep.subr.mxu0 0.0
    %210 = vmatpush1.msra.mxu0 0.0
    %211 = vmatprep.subr.mxu0 0.0
    %212 = vmatpush1.msra.mxu0 0.0
    %213 = vmatprep.subr.mxu0 0.0
    %214 = vmatpush1.msra.mxu0 0.0
    %215 = vmatprep.subr.mxu0 0.0
    %216 = vmatpush1.msra.mxu0 0.0
    %217 = vmatprep.subr.mxu0 0.0
    %218 = vmatpush1.msra.mxu0 0.0
    %219 = vmatprep.subr.mxu0 0.0
    %220 = vmatpush1.msra.mxu0 0.0
    %221 = vmatprep.subr.mxu0 0.0
    %222 = vmatpush1.msra.mxu0 0.0
    %223 = vmatprep.subr.mxu0 0.0
    %224 = vmatpush1.msra.mxu0 0.0
    %225 = vmatprep.subr.mxu0 0.0
    %226 = vmatpush1.msra.mxu0 0.0
    %227 = vmatprep.subr.mxu0 0.0
    %228 = vmatpush1.msra.mxu0 0.0
    %229 = vmatprep.subr.mxu0 0.0
    %230 = vmatpush1.msra.mxu0 0.0
    %231 = vmatprep.subr.mxu0 0.0
    %232 = vmatpush1.msra.mxu0 0.0
    %233 = vmatprep.subr.mxu0 0.0
    %234 = vmatpush1.msra.mxu0 0.0
    %235 = vmatprep.subr.mxu0 0.0
    %236 = vmatpush1.msra.mxu0 0.0
    %237 = vmatprep.subr.mxu0 0.0
    %238 = vmatpush1.msra.mxu0 0.0
    %239 = vmatprep.mubr.f32.mxu0 0.0
    %240 = vmatmul.mubr.f32.gmra.mrb[0].mxu0 %v158
    %v241 = vpop.f32.mrb[0].mxu0
    %v242 = vadd.f32 0.0, %v241
    %v243 = vpop.f32.mrb[0].mxu0
    %244 = vdwg.mxu0
    %v245 = vtanh.pop %v242
    %v246 = vld [vmem:[#allocation8] sm:$0xff]
    %v247 = vld [vmem:[#allocation8 + $0x8] sm:$0xff]
    %v248 = vld [vmem:[#allocation8 + $0x10] sm:$0xff]
    %v249 = vld [vmem:[#allocation8 + $0x18] sm:$0xff]
    %v250 = vld [vmem:[#allocation8 + $0x20] sm:$0xff]
    %v251 = vld [vmem:[#allocation8 + $0x28] sm:$0xff]
    %v252 = vld [vmem:[#allocation8 + $0x30] sm:$0xff]
    %v253 = vld [vmem:[#allocation8 + $0x38] sm:$0xff]
    %v254 = vld [vmem:[#allocation8 + $0x40] sm:$0xff]
    %v255 = vld [vmem:[#allocation8 + $0x48] sm:$0xff]
    %v256 = vld [vmem:[#allocation8 + $0x50] sm:$0xff]
    %v257 = vld [vmem:[#allocation8 + $0x58] sm:$0xff]
    %v258 = vld [vmem:[#allocation8 + $0x60] sm:$0xff]
    %v259 = vld [vmem:[#allocation8 + $0x68] sm:$0xff]
    %v260 = vld [vmem:[#allocation8 + $0x70] sm:$0xff]
    %v261 = vld [vmem:[#allocation8 + $0x78] sm:$0xff]
    %262 = vmatprep.subr.mxu0 0.0
    %263 = vmatpush1.msra.mxu0 %v246
    %264 = vmatprep.subr.mxu0 0.0
    %265 = vmatpush1.msra.mxu0 %v247
    %266 = vmatprep.subr.mxu0 0.0
    %267 = vmatpush1.msra.mxu0 %v248
    %268 = vmatprep.subr.mxu0 0.0
    %269 = vmatpush1.msra.mxu0 %v249
    %270 = vmatprep.subr.mxu0 0.0
    %271 = vmatpush1.msra.mxu0 %v250
    %272 = vmatprep.subr.mxu0 0.0
    %273 = vmatpush1.msra.mxu0 %v251
    %274 = vmatprep.subr.mxu0 0.0
    %275 = vmatpush1.msra.mxu0 %v252
    %276 = vmatprep.subr.mxu0 0.0
    %277 = vmatpush1.msra.mxu0 %v253
    %278 = vmatprep.subr.mxu0 0.0
    %279 = vmatpush1.msra.mxu0 %v254
    %280 = vmatprep.subr.mxu0 0.0
    %281 = vmatpush1.msra.mxu0 %v255
    %282 = vmatprep.subr.mxu0 0.0
    %283 = vmatpush1.msra.mxu0 %v256
    %284 = vmatprep.subr.mxu0 0.0
    %285 = vmatpush1.msra.mxu0 %v257
    %286 = vmatprep.subr.mxu0 0.0
    %287 = vmatpush1.msra.mxu0 %v258
    %288 = vmatprep.subr.mxu0 0.0
    %289 = vmatpush1.msra.mxu0 %v259
    %290 = vmatprep.subr.mxu0 0.0
    %291 = vmatpush1.msra.mxu0 %v260
    %292 = vmatprep.subr.mxu0 0.0
    %293 = vmatpush1.msra.mxu0 %v261
    %294 = vmatprep.subr.mxu0 0.0
    %295 = vmatpush1.msra.mxu0 0.0
    %296 = vmatprep.subr.mxu0 0.0
    %297 = vmatpush1.msra.mxu0 0.0
    %298 = vmatprep.subr.mxu0 0.0
    %299 = vmatpush1.msra.mxu0 0.0
    %300 = vmatprep.subr.mxu0 0.0
    %301 = vmatpush1.msra.mxu0 0.0
    %302 = vmatprep.subr.mxu0 0.0
    %303 = vmatpush1.msra.mxu0 0.0
    %304 = vmatprep.subr.mxu0 0.0
    %305 = vmatpush1.msra.mxu0 0.0
    %306 = vmatprep.subr.mxu0 0.0
    %307 = vmatpush1.msra.mxu0 0.0
    %308 = vmatprep.subr.mxu0 0.0
    %309 = vmatpush1.msra.mxu0 0.0
    %310 = vmatprep.subr.mxu0 0.0
    %311 = vmatpush1.msra.mxu0 0.0
    %312 = vmatprep.subr.mxu0 0.0
    %313 = vmatpush1.msra.mxu0 0.0
    %314 = vmatprep.subr.mxu0 0.0
    %315 = vmatpush1.msra.mxu0 0.0
    %316 = vmatprep.subr.mxu0 0.0
    %317 = vmatpush1.msra.mxu0 0.0
    %318 = vmatprep.subr.mxu0 0.0
    %319 = vmatpush1.msra.mxu0 0.0
    %320 = vmatprep.subr.mxu0 0.0
    %321 = vmatpush1.msra.mxu0 0.0
    %322 = vmatprep.subr.mxu0 0.0
    %323 = vmatpush1.msra.mxu0 0.0
    %324 = vmatprep.subr.mxu0 0.0
    %325 = vmatpush1.msra.mxu0 0.0
    %326 = vmatprep.mubr.f32.mxu0 0.0
    %327 = vmatmul.mubr.f32.gmra.mrb[0].mxu0 %v245
    %v328 = vpop.f32.mrb[0].mxu0
    %v329 = vadd.f32 0.0, %v328
    %v330 = vpop.f32.mrb[0].mxu0
    %331 = vdwg.mxu0
    %332 = vst [vmem:[#allocation10] sm:$0xff] %v329
    // Predicated region
    $region34: #{tpu_custom_call.1} parent=1 // pred_check
      _
    $region35: #{tpu_custom_call.1} parent=1 // pred_check_branch
      %334 = sbr.rel (0) target = $region37
    $region36: #{tpu_custom_call.1} parent=1 // pred_region
      %s336 = ssub.s32 128, 128
      %337 = vsyncadd [#allocation4], %s336
      %s339 = sshll.u32 [#allocation10], 4
      %s340 = int_to_ptr.vmem [resolvable:$true] %s339
      %342 = dma.vmem_to_hbm [thread:$0]  %s340, 128, %s4, [#allocation4]
    $region37: #{tpu_custom_call.1} parent=1 // pred_fallthru
      _
    // Predicated region
    $region38: #{tpu_custom_call.1} parent=1 // pred_check
      _
    $region39: #{tpu_custom_call.1} parent=1 // pred_check_branch
      %344 = sbr.rel (0) target = $region41
    $region40: #{tpu_custom_call.1} parent=1 // pred_region
      %345 = dma.done [#allocation4], 128
    $region41: #{tpu_custom_call.1} parent=1 // pred_fallthru
      _
    %346 = vsyncpa [#allocation3], 1
    %347 = vsyncpa [#allocation6], 1
    %348 = vsyncpa [#allocation9], 1
    %349 = vsyncpa [#allocation4], 1

</llo_original>
